<compile_context>
chip_gen: v7x
topology: tpu7x:2x2x1
jax: 0.10.0
libtpu: 0.0.40
codegen_flags: <defaults>
</compile_context>

<pallas_src>
import math

import jax
import jax.numpy as jnp
from jax.experimental import pallas as pl
from jax.experimental.pallas import tpu as pltpu


def _round_up(x, m):
    return ((x + m - 1) // m) * m


def wide_kernel(rng_ref, x_ref, w_ref, b_ref, o_ref):
    """One (batch_tile, vocab_tile) grid step.

    rng_ref: (2, F) int32 SMEM  per-feature [min, max] index (scalar prefetch)
    x_ref:   (tb, F) int32      indices for this batch tile
    w_ref:   (tv, P) f32        embedding rows for this vocab tile
    b_ref:   (1, P)  f32        bias
    o_ref:   (tb, P) f32        output tile; VMEM-resident across the vocab axis,
                                used directly as the accumulator.
    """
    k = pl.program_id(1)
    tv = w_ref.shape[0]
    F = x_ref.shape[1]
    tile_lo = k * tv

    @pl.when(k == 0)
    def _init():
        o_ref[...] = jnp.broadcast_to(b_ref[...], o_ref.shape)

    # Shift indices into tile-local coordinates once (cheap (tb, F) op) instead
    # of adding the tile base to a (tb, tv) iota for every feature.
    x_local = x_ref[...] - tile_lo                               # (tb, F) int32
    ids = jax.lax.broadcasted_iota(jnp.int32, (1, tv), 1)        # (1, tv) int32

    for f in range(F):  # F is small & static -> unrolled
        lo = rng_ref[0, f]
        hi = rng_ref[1, f]
        # run this feature only if its id range intersects [tile_lo, tile_lo+tv)
        hit = jnp.logical_and(lo < tile_lo + tv, hi >= tile_lo)

        @pl.when(hit)
        def _acc(f=f):
            onehot = (x_local[:, f:f + 1] == ids).astype(jnp.float32)  # (tb, tv)
            o_ref[...] += jnp.dot(onehot, w_ref[...],
                                  preferred_element_type=jnp.float32)


def wide_forward(x_idx, w, bias, *, tb=256, tv=2048):
    """Wide forward pass.

    x_idx: (B, F) integer indices in [0, wide_dim]
    w:     (wide_dim + 1, pred_dim) float embedding table, row 0 == 0 (padding_idx)
    bias:  (pred_dim,) float
    returns (B, pred_dim) float32
    """
    B, F = x_idx.shape
    V, P = w.shape

    # tile sizes: 8-aligned batch tiles, 128-aligned (lane-dense) vocab tiles
    tb = min(_round_up(tb, 8), _round_up(B, 8))
    if B > 8:
        # ensure the parallel batch axis has >= 2 grid points (v7x megacore)
        tb = min(tb, _round_up(-(-B // 2), 8))
    tv = min(_round_up(tv, 128), _round_up(V, 128))
    B_pad = _round_up(B, tb)
    V_pad = _round_up(V, tv)
    n_b = B_pad // tb
    n_k = V_pad // tv

    x_idx = x_idx.astype(jnp.int32)
    w = w.astype(jnp.float32)

    # per-feature [min, max] over the batch -> SMEM scalar prefetch (tile pruning)
    ranges = jnp.stack([jnp.min(x_idx, axis=0), jnp.max(x_idx, axis=0)])  # (2, F)

    # pad only when the shapes require it (pre-pad W at init to skip this copy);
    # batch pad rows use index 0 (zero padding row), vocab pad rows are zero.
    x_pad = x_idx if B_pad == B else (
        jnp.zeros((B_pad, F), jnp.int32).at[:B].set(x_idx))
    w_pad = w if V_pad == V else (
        jnp.zeros((V_pad, P), jnp.float32).at[:V].set(w))
    b2 = bias.reshape(1, P).astype(jnp.float32)

    cost = pl.CostEstimate(
        flops=int(2 * B_pad * V_pad * P + 2 * B_pad * V_pad),
        transcendentals=0,
        bytes_accessed=int(
            x_pad.size * 4 + w_pad.size * 4 * n_b + B_pad * P * 4 + P * 4
        ),
    )

    out_pad = pl.pallas_call(
        wide_kernel,
        out_shape=jax.ShapeDtypeStruct((B_pad, P), jnp.float32),
        grid_spec=pltpu.PrefetchScalarGridSpec(
            num_scalar_prefetch=1,
            grid=(n_b, n_k),
            in_specs=[
                pl.BlockSpec((tb, F), lambda i, k, rng: (i, 0)),   # X batch tile
                pl.BlockSpec((tv, P), lambda i, k, rng: (k, 0)),   # W vocab tile
                pl.BlockSpec((1, P), lambda i, k, rng: (0, 0)),    # bias
            ],
            out_specs=pl.BlockSpec((tb, P), lambda i, k, rng: (i, 0)),
        ),
        compiler_params=pltpu.CompilerParams(
            dimension_semantics=("parallel", "arbitrary"),
            vmem_limit_bytes=32 * 1024 * 1024,
        ),
        cost_estimate=cost,
    )(ranges, x_pad, w_pad, b2)

    return out_pad if B_pad == B else out_pad[:B]


def init_wide_params(key, wide_dim, pred_dim):
    """Deterministic init mimicking Wide._reset_parameters shapes/semantics."""
    vocab = wide_dim + 1
    k_w, k_b = jax.random.split(key)
    # kaiming_uniform_(a=sqrt(5)) on a (vocab, pred_dim) weight -> bound = 1/sqrt(pred_dim)
    bound = 1.0 / math.sqrt(pred_dim)
    w = jax.random.uniform(k_w, (vocab, pred_dim), jnp.float32, -bound, bound)
    w = w.at[0].set(0.0)  # padding_idx=0
    bias = jax.random.uniform(k_b, (pred_dim,), jnp.float32, -bound, bound)
    return w, bias


def _reference(w, bias, x_idx):
    return jnp.take(w, x_idx, axis=0).sum(axis=1) + bias


if __name__ == "__main__":
    key = jax.random.PRNGKey(0)

    # --- test 1: module-example-sized shapes (single tile, includes idx 0) ---
    wide_dim, pred_dim, batch, n_features = 10, 1, 4, 4
    k_params, k_x, key = jax.random.split(key, 3)
    w, bias = init_wide_params(k_params, wide_dim, pred_dim)
    x_idx = jax.random.randint(
        k_x, (batch, n_features), 0, wide_dim + 1, dtype=jnp.int32
    )

    out = wide_forward(x_idx, w, bias)
    out = jax.block_until_ready(out)
    ref = _reference(w, bias, x_idx)
    assert out.shape == (batch, pred_dim), out.shape
    assert jnp.allclose(out, ref, atol=1e-5, rtol=1e-5), (out, ref)

    # --- test 2: multi-tile grid + realistic contiguous per-feature ranges ---
    wide_dim2, pred_dim2, batch2, n_features2 = 300, 3, 20, 6
    k_params2, k_x2, key = jax.random.split(key, 3)
    w2, bias2 = init_wide_params(k_params2, wide_dim2, pred_dim2)
    # feature f takes ids in [1 + 50*f, 1 + 50*(f+1)) -> exercises range pruning
    base = jax.random.randint(k_x2, (batch2, n_features2), 0, 50, dtype=jnp.int32)
    offsets = 1 + 50 * jnp.arange(n_features2, dtype=jnp.int32)
    x_idx2 = base + offsets[None, :]

    out2 = wide_forward(x_idx2, w2, bias2, tb=8, tv=128)  # grid (3, 3)
    out2 = jax.block_until_ready(out2)
    ref2 = _reference(w2, bias2, x_idx2)
    assert out2.shape == (batch2, pred_dim2), out2.shape
    assert jnp.allclose(out2, ref2, atol=1e-5, rtol=1e-5), (out2, ref2)

    # --- test 3: shapes that need no padding (no extra HBM copies path) ------
    wide_dim3, pred_dim3, batch3, n_features3 = 127, 2, 16, 5
    k_params3, k_x3 = jax.random.split(key)
    w3, bias3 = init_wide_params(k_params3, wide_dim3, pred_dim3)
    x_idx3 = jax.random.randint(
        k_x3, (batch3, n_features3), 0, wide_dim3 + 1, dtype=jnp.int32
    )

    out3 = wide_forward(x_idx3, w3, bias3)
    out3 = jax.block_until_ready(out3)
    ref3 = _reference(w3, bias3, x_idx3)
    assert out3.shape == (batch3, pred_dim3), out3.shape
    assert jnp.allclose(out3, ref3, atol=1e-5, rtol=1e-5), (out3, ref3)

    print("KERNEL_OK")
</pallas_src>

<mosaic_0001>
module attributes {stable_mosaic.version = 11 : i64} {
  func.func @wide_kernel(%arg0: i32, %arg1: i32, %arg2: memref<2x4xi32, #tpu.memory_space<smem>>, %arg3: memref<8x4xi32, #tpu.memory_space<vmem>>, %arg4: memref<128x1xf32, #tpu.memory_space<vmem>>, %arg5: memref<1x1xf32, #tpu.memory_space<vmem>>, %arg6: memref<8x1xf32, #tpu.memory_space<vmem>>) attributes {dimension_semantics = [#tpu.dimension_semantics<parallel>, #tpu.dimension_semantics<arbitrary>], iteration_bounds = array<i64: 1, 1>, scalar_prefetch = 1 : i64, scratch_operands = 0 : i64, tpu.core_type = #tpu.core_type<tc>, window_params = [{transform_indices = @transform_0, window_bounds = array<i64: 8, 4>}, {transform_indices = @transform_1, window_bounds = array<i64: 128, 1>}, {pipeline_mode = #tpu.pipeline_mode<synchronous>, transform_indices = @transform_2, window_bounds = array<i64: 1, 1>}, {transform_indices = @transform_3, window_bounds = array<i64: 8, 1>}]} {
    %c128_i32 = arith.constant 128 : i32
    %0 = arith.muli %arg1, %c128_i32 : i32
    %c0_i32 = arith.constant 0 : i32
    %1 = arith.cmpi eq, %arg1, %c0_i32 : i32
    %2 = arith.extui %1 : i1 to i32
    %c0_i32_0 = arith.constant 0 : i32
    %3 = arith.cmpi ne, %2, %c0_i32_0 : i32
    scf.if %3 {
      %c0_23 = arith.constant 0 : index
      %c0_24 = arith.constant 0 : index
      %40 = vector.load %arg5[%c0_23, %c0_24] : memref<1x1xf32, #tpu.memory_space<vmem>>, vector<1x1xf32>
      %41 = vector.shape_cast %40 : vector<1x1xf32> to vector<1x1xf32>
      %42 = vector.broadcast %41 : vector<1x1xf32> to vector<8x1xf32>
      %c0_25 = arith.constant 0 : index
      %c0_26 = arith.constant 0 : index
      %43 = vector.load %arg6[%c0_25, %c0_26] : memref<8x1xf32, #tpu.memory_space<vmem>>, vector<8x1xf32>
      tpu.vector_store %arg6[%c0_25, %c0_26], %42 {strides = array<i32>} : memref<8x1xf32, #tpu.memory_space<vmem>>, vector<8x1xf32>,
    } else {
    }
    %c0 = arith.constant 0 : index
    %c0_1 = arith.constant 0 : index
    %4 = vector.load %arg3[%c0, %c0_1] : memref<8x4xi32, #tpu.memory_space<vmem>>, vector<8x4xi32>
    %5 = vector.broadcast %0 : i32 to vector<8x4xi32>
    %6 = arith.subi %4, %5 : vector<8x4xi32>
    %7 = tpu.iota {dimensions = array<i32: 1>} : vector<1x128xi32>
    %c0_2 = arith.constant 0 : index
    %c0_3 = arith.constant 0 : index
    %8 = memref.load %arg2[%c0_2, %c0_3] : memref<2x4xi32, #tpu.memory_space<smem>>
    %c1 = arith.constant 1 : index
    %c0_4 = arith.constant 0 : index
    %9 = memref.load %arg2[%c1, %c0_4] : memref<2x4xi32, #tpu.memory_space<smem>>
    %c128_i32_5 = arith.constant 128 : i32
    %10 = arith.addi %0, %c128_i32_5 : i32
    %11 = arith.cmpi slt, %8, %10 : i32
    %12 = arith.cmpi sge, %9, %0 : i32
    %13 = arith.andi %11, %12 : i1
    %14 = arith.extui %13 : i1 to i32
    %c0_i32_6 = arith.constant 0 : i32
    %15 = arith.cmpi ne, %14, %c0_i32_6 : i32
    scf.if %15 {
      %40 = vector.extract_strided_slice %6 {offsets = [0, 0], sizes = [8, 1], strides = [1, 1]} : vector<8x4xi32> to vector<8x1xi32>
      %41 = vector.broadcast %40 : vector<8x1xi32> to vector<8x128xi32>
      %42 = vector.broadcast %7 : vector<1x128xi32> to vector<8x128xi32>
      %43 = arith.cmpi eq, %41, %42 : vector<8x128xi32>
      %44 = arith.extui %43 : vector<8x128xi1> to vector<8x128xi32>
      %45 = arith.sitofp %44 : vector<8x128xi32> to vector<8x128xf32>
      %c0_23 = arith.constant 0 : index
      %c0_24 = arith.constant 0 : index
      %46 = vector.load %arg6[%c0_23, %c0_24] : memref<8x1xf32, #tpu.memory_space<vmem>>, vector<8x1xf32>
      %c0_25 = arith.constant 0 : index
      %c0_26 = arith.constant 0 : index
      %47 = vector.load %arg4[%c0_25, %c0_26] : memref<128x1xf32, #tpu.memory_space<vmem>>, vector<128x1xf32>
      %cst = arith.constant dense<0.000000e+00> : vector<8x1xf32>
      %48 = tpu.matmul %45, %47, %cst {dimension_numbers = #tpu.dot_dimension_numbers<[1], [0], [0], [1], [0, 0, 1, 1], [], []>} : vector<8x128xf32>, vector<128x1xf32>, vector<8x1xf32> -> vector<8x1xf32>
      %49 = arith.addf %46, %48 : vector<8x1xf32>
      %c0_27 = arith.constant 0 : index
      %c0_28 = arith.constant 0 : index
      %50 = vector.load %arg6[%c0_27, %c0_28] : memref<8x1xf32, #tpu.memory_space<vmem>>, vector<8x1xf32>
      tpu.vector_store %arg6[%c0_27, %c0_28], %49 {strides = array<i32>} : memref<8x1xf32, #tpu.memory_space<vmem>>, vector<8x1xf32>,
    } else {
    }
    %c0_7 = arith.constant 0 : index
    %c1_8 = arith.constant 1 : index
    %16 = memref.load %arg2[%c0_7, %c1_8] : memref<2x4xi32, #tpu.memory_space<smem>>
    %c1_9 = arith.constant 1 : index
    %c1_10 = arith.constant 1 : index
    %17 = memref.load %arg2[%c1_9, %c1_10] : memref<2x4xi32, #tpu.memory_space<smem>>
    %c128_i32_11 = arith.constant 128 : i32
    %18 = arith.addi %0, %c128_i32_11 : i32
    %19 = arith.cmpi slt, %16, %18 : i32
    %20 = arith.cmpi sge, %17, %0 : i32
    %21 = arith.andi %19, %20 : i1
    %22 = arith.extui %21 : i1 to i32
    %c0_i32_12 = arith.constant 0 : i32
    %23 = arith.cmpi ne, %22, %c0_i32_12 : i32
    scf.if %23 {
      %40 = vector.extract_strided_slice %6 {offsets = [0, 1], sizes = [8, 1], strides = [1, 1]} : vector<8x4xi32> to vector<8x1xi32>
      %41 = vector.broadcast %40 : vector<8x1xi32> to vector<8x128xi32>
      %42 = vector.broadcast %7 : vector<1x128xi32> to vector<8x128xi32>
      %43 = arith.cmpi eq, %41, %42 : vector<8x128xi32>
      %44 = arith.extui %43 : vector<8x128xi1> to vector<8x128xi32>
      %45 = arith.sitofp %44 : vector<8x128xi32> to vector<8x128xf32>
      %c0_23 = arith.constant 0 : index
      %c0_24 = arith.constant 0 : index
      %46 = vector.load %arg6[%c0_23, %c0_24] : memref<8x1xf32, #tpu.memory_space<vmem>>, vector<8x1xf32>
      %c0_25 = arith.constant 0 : index
      %c0_26 = arith.constant 0 : index
      %47 = vector.load %arg4[%c0_25, %c0_26] : memref<128x1xf32, #tpu.memory_space<vmem>>, vector<128x1xf32>
      %cst = arith.constant dense<0.000000e+00> : vector<8x1xf32>
      %48 = tpu.matmul %45, %47, %cst {dimension_numbers = #tpu.dot_dimension_numbers<[1], [0], [0], [1], [0, 0, 1, 1], [], []>} : vector<8x128xf32>, vector<128x1xf32>, vector<8x1xf32> -> vector<8x1xf32>
      %49 = arith.addf %46, %48 : vector<8x1xf32>
      %c0_27 = arith.constant 0 : index
      %c0_28 = arith.constant 0 : index
      %50 = vector.load %arg6[%c0_27, %c0_28] : memref<8x1xf32, #tpu.memory_space<vmem>>, vector<8x1xf32>
      tpu.vector_store %arg6[%c0_27, %c0_28], %49 {strides = array<i32>} : memref<8x1xf32, #tpu.memory_space<vmem>>, vector<8x1xf32>,
    } else {
    }
    %c0_13 = arith.constant 0 : index
    %c2 = arith.constant 2 : index
    %24 = memref.load %arg2[%c0_13, %c2] : memref<2x4xi32, #tpu.memory_space<smem>>
    %c1_14 = arith.constant 1 : index
    %c2_15 = arith.constant 2 : index
    %25 = memref.load %arg2[%c1_14, %c2_15] : memref<2x4xi32, #tpu.memory_space<smem>>
    %c128_i32_16 = arith.constant 128 : i32
    %26 = arith.addi %0, %c128_i32_16 : i32
    %27 = arith.cmpi slt, %24, %26 : i32
    %28 = arith.cmpi sge, %25, %0 : i32
    %29 = arith.andi %27, %28 : i1
    %30 = arith.extui %29 : i1 to i32
    %c0_i32_17 = arith.constant 0 : i32
    %31 = arith.cmpi ne, %30, %c0_i32_17 : i32
    scf.if %31 {
      %40 = vector.extract_strided_slice %6 {offsets = [0, 2], sizes = [8, 1], strides = [1, 1]} : vector<8x4xi32> to vector<8x1xi32>
      %41 = vector.broadcast %40 : vector<8x1xi32> to vector<8x128xi32>
      %42 = vector.broadcast %7 : vector<1x128xi32> to vector<8x128xi32>
      %43 = arith.cmpi eq, %41, %42 : vector<8x128xi32>
      %44 = arith.extui %43 : vector<8x128xi1> to vector<8x128xi32>
      %45 = arith.sitofp %44 : vector<8x128xi32> to vector<8x128xf32>
      %c0_23 = arith.constant 0 : index
      %c0_24 = arith.constant 0 : index
      %46 = vector.load %arg6[%c0_23, %c0_24] : memref<8x1xf32, #tpu.memory_space<vmem>>, vector<8x1xf32>
      %c0_25 = arith.constant 0 : index
      %c0_26 = arith.constant 0 : index
      %47 = vector.load %arg4[%c0_25, %c0_26] : memref<128x1xf32, #tpu.memory_space<vmem>>, vector<128x1xf32>
      %cst = arith.constant dense<0.000000e+00> : vector<8x1xf32>
      %48 = tpu.matmul %45, %47, %cst {dimension_numbers = #tpu.dot_dimension_numbers<[1], [0], [0], [1], [0, 0, 1, 1], [], []>} : vector<8x128xf32>, vector<128x1xf32>, vector<8x1xf32> -> vector<8x1xf32>
      %49 = arith.addf %46, %48 : vector<8x1xf32>
      %c0_27 = arith.constant 0 : index
      %c0_28 = arith.constant 0 : index
      %50 = vector.load %arg6[%c0_27, %c0_28] : memref<8x1xf32, #tpu.memory_space<vmem>>, vector<8x1xf32>
      tpu.vector_store %arg6[%c0_27, %c0_28], %49 {strides = array<i32>} : memref<8x1xf32, #tpu.memory_space<vmem>>, vector<8x1xf32>,
    } else {
    }
    %c0_18 = arith.constant 0 : index
    %c3 = arith.constant 3 : index
    %32 = memref.load %arg2[%c0_18, %c3] : memref<2x4xi32, #tpu.memory_space<smem>>
    %c1_19 = arith.constant 1 : index
    %c3_20 = arith.constant 3 : index
    %33 = memref.load %arg2[%c1_19, %c3_20] : memref<2x4xi32, #tpu.memory_space<smem>>
    %c128_i32_21 = arith.constant 128 : i32
    %34 = arith.addi %0, %c128_i32_21 : i32
    %35 = arith.cmpi slt, %32, %34 : i32
    %36 = arith.cmpi sge, %33, %0 : i32
    %37 = arith.andi %35, %36 : i1
    %38 = arith.extui %37 : i1 to i32
    %c0_i32_22 = arith.constant 0 : i32
    %39 = arith.cmpi ne, %38, %c0_i32_22 : i32
    scf.if %39 {
      %40 = vector.extract_strided_slice %6 {offsets = [0, 3], sizes = [8, 1], strides = [1, 1]} : vector<8x4xi32> to vector<8x1xi32>
      %41 = vector.broadcast %40 : vector<8x1xi32> to vector<8x128xi32>
      %42 = vector.broadcast %7 : vector<1x128xi32> to vector<8x128xi32>
      %43 = arith.cmpi eq, %41, %42 : vector<8x128xi32>
      %44 = arith.extui %43 : vector<8x128xi1> to vector<8x128xi32>
      %45 = arith.sitofp %44 : vector<8x128xi32> to vector<8x128xf32>
      %c0_23 = arith.constant 0 : index
      %c0_24 = arith.constant 0 : index
      %46 = vector.load %arg6[%c0_23, %c0_24] : memref<8x1xf32, #tpu.memory_space<vmem>>, vector<8x1xf32>
      %c0_25 = arith.constant 0 : index
      %c0_26 = arith.constant 0 : index
      %47 = vector.load %arg4[%c0_25, %c0_26] : memref<128x1xf32, #tpu.memory_space<vmem>>, vector<128x1xf32>
      %cst = arith.constant dense<0.000000e+00> : vector<8x1xf32>
      %48 = tpu.matmul %45, %47, %cst {dimension_numbers = #tpu.dot_dimension_numbers<[1], [0], [0], [1], [0, 0, 1, 1], [], []>} : vector<8x128xf32>, vector<128x1xf32>, vector<8x1xf32> -> vector<8x1xf32>
      %49 = arith.addf %46, %48 : vector<8x1xf32>
      %c0_27 = arith.constant 0 : index
      %c0_28 = arith.constant 0 : index
      %50 = vector.load %arg6[%c0_27, %c0_28] : memref<8x1xf32, #tpu.memory_space<vmem>>, vector<8x1xf32>
      tpu.vector_store %arg6[%c0_27, %c0_28], %49 {strides = array<i32>} : memref<8x1xf32, #tpu.memory_space<vmem>>, vector<8x1xf32>,
    } else {
    }
    return
  }
  func.func @transform_0(%arg0: i32, %arg1: i32, %arg2: memref<2x4xi32, #tpu.memory_space<smem>>) -> (i32, i32) {
    %c0_i32 = arith.constant 0 : i32
    %c0_i32_0 = arith.constant 0 : i32
    return %arg0, %c0_i32 : i32, i32
  }
  func.func @transform_1(%arg0: i32, %arg1: i32, %arg2: memref<2x4xi32, #tpu.memory_space<smem>>) -> (i32, i32) {
    %c0_i32 = arith.constant 0 : i32
    %c0_i32_0 = arith.constant 0 : i32
    return %arg1, %c0_i32 : i32, i32
  }
  func.func @transform_2(%arg0: i32, %arg1: i32, %arg2: memref<2x4xi32, #tpu.memory_space<smem>>) -> (i32, i32) {
    %c0_i32 = arith.constant 0 : i32
    %c0_i32_0 = arith.constant 0 : i32
    %c0_i32_1 = arith.constant 0 : i32
    return %c0_i32, %c0_i32_0 : i32, i32
  }
  func.func @transform_3(%arg0: i32, %arg1: i32, %arg2: memref<2x4xi32, #tpu.memory_space<smem>>) -> (i32, i32) {
    %c0_i32 = arith.constant 0 : i32
    %c0_i32_0 = arith.constant 0 : i32
    return %arg0, %c0_i32 : i32, i32
  }
}

</mosaic_0001>

<llo_original>
// kernel: tpu_custom_call.1
$region0: #{tpu_custom_call.1}
  #allocation0 [shape = 'u32[]', space=smem, size = 0x4, offset = 0x4, fixed_abs, tag = 'smem constant byte address 0x4 - core index']
  #allocation1 [shape = 'u32[144,128]{1,0:T(1,128)}', space=vmem, size = 0x12000, scoped, tag = 'internal scratch']
  #allocation2 [shape = 's32[1]{0}', space=sflag, size = 0x4, scoped, tag = 'scoped memory for tpu_custom_call.1']
  #allocation3 [shape = 'u8[1024]{0}', space=smem, size = 0x400, scoped, tag = 'prefetched SMEM operand 0']
  #allocation4 [shape = 'f32[1,1]{1,0:T(1,128)S(1)}', space=vmem, size = 0x200, scoped, tag = 'scoped memory for tpu_custom_call.1']
  %s0 = inlined_call_operand.vmem [shape: s32[2,4], index: 0, kind: input, shape index: {}]
  %s1 = inlined_call_operand.vmem [shape: s32[8,4], index: 1, kind: input, shape index: {}]
  %s2 = inlined_call_operand.vmem [shape: f32[128,1], index: 2, kind: input, shape index: {}]
  %s3 = inlined_call_operand.<no memory space> [shape: f32[1,1], index: 3, kind: input, shape index: {}]
  %s4 = inlined_call_operand.vmem [shape: f32[8,1], index: 4, kind: output, shape index: {}]
  %s5 = sld [smem:[#allocation0]]
  $region42: #{tpu_custom_call.1} parent=0
    _
  %s7 = ssub.s32 1, %s5
  %s8 = scalar_select 0, %s7, %s5
  %s9 = sshll.u32 %s0, 4
  %s10 = int_to_ptr.vmem [resolvable:$true] %s9
  %12 = dma.vmem_to_smem %s10, 32, [#allocation3], [#allocation2]
  %v13 = vstv %s3
  %14 = vst [vmem:[#allocation4] sm:$0x1] %v13
  %15 = dma.done [#allocation2], 32
  %16 = sfence
  // Predicated region
  $region2: #{tpu_custom_call.1} parent=0 // pred_check
    _
  $region3: #{tpu_custom_call.1} parent=0 // pred_check_branch
    %18 = sbr.rel (0) target = $region5
  $region4: #{tpu_custom_call.1} parent=0 // pred_region
    _
  $region5: #{tpu_custom_call.1} parent=0 // pred_fallthru
    _
  // Predicated region
  $region6: #{tpu_custom_call.1} parent=0 // pred_check
    _
  $region7: #{tpu_custom_call.1} parent=0 // pred_check_branch
    %20 = sbr.rel (0) target = $region9
  $region8: #{tpu_custom_call.1} parent=0 // pred_region
    _
  $region9: #{tpu_custom_call.1} parent=0 // pred_fallthru
    _
  // Predicated region
  $region10: #{tpu_custom_call.1} parent=0 // pred_check
    _
  $region11: #{tpu_custom_call.1} parent=0 // pred_check_branch
    %22 = sbr.rel (0) target = $region13
  $region12: #{tpu_custom_call.1} parent=0 // pred_region
    _
  $region13: #{tpu_custom_call.1} parent=0 // pred_fallthru
    _
  %s23 = smul.u32 0, 128
  %p24 = scmp.eq.s32.totalorder 0, 0
  // Predicated region
  $region14: #{tpu_custom_call.1} parent=0 // pred_check
    %p25 = pneg %p24
  $region15: #{tpu_custom_call.1} parent=0 // pred_check_branch
    %27 = sbr.rel (%p25) target = $region17
  $region16: #{tpu_custom_call.1} parent=0 // pred_region
    %v28 = vld [vmem:[#allocation4] sm:$0x1]
    %v30 = vlaneseq
    %v31 = vshrl.u32 %v30, 7
    %v32 = vsub.s32 0, %v31
    %v33 = vrot.slane %v28, %v32
    %vm35 = vcmask 7168
    %36 = vst.msk [vmem:[%s4] sm:$0xff] %vm35, %v33
  $region17: #{tpu_custom_call.1} parent=0 // pred_fallthru
    _
  %v37 = vld [vmem:[%s1] sm:$0xff]
  %v38 = vstv %s23
  %v39 = vsub.s32 %v37, %v38
  %v40 = vlaneseq
  %v41 = vand.u32 %v40, 127
  %s42 = sld [smem:[#allocation3]]
  %s43 = sld [smem:[#allocation3 + $0x80]]
  %s44 = sadd.s32 %s23, 128
  %p45 = scmp.lt.s32.totalorder %s42, %s44
  %p46 = scmp.ge.s32.totalorder %s43, %s23
  %p47 = pnand %p45, %p46
  %p48 = pneg %p47
  // Predicated region
  $region18: #{tpu_custom_call.1} parent=0 // pred_check
    _
  $region19: #{tpu_custom_call.1} parent=0 // pred_check_branch
    %50 = sbr.rel (%p47) target = $region21
  $region20: #{tpu_custom_call.1} parent=0 // pred_region
    %51 = vset.pattern.permute.xlu0 0
    %52 = vperm.xlu0 %51, %v39
    %v53 = vpop.permute.xlu0 %52
    %vm54 = vcmp.eq.s32.totalorder %v53, %v41
    %v55 = vsel %vm54, 1, 0
    %v56 = vcvt.s32.f32 %v55
    %v57 = vld [vmem:[%s4] sm:$0xff]
    %v58 = vld [vmem:[%s2] sm:$0xff]
    %v59 = vld [vmem:[%s2 + $0x8] sm:$0xff]
    %v60 = vld [vmem:[%s2 + $0x10] sm:$0xff]
    %v61 = vld [vmem:[%s2 + $0x18] sm:$0xff]
    %v62 = vld [vmem:[%s2 + $0x20] sm:$0xff]
    %v63 = vld [vmem:[%s2 + $0x28] sm:$0xff]
    %v64 = vld [vmem:[%s2 + $0x30] sm:$0xff]
    %v65 = vld [vmem:[%s2 + $0x38] sm:$0xff]
    %v66 = vld [vmem:[%s2 + $0x40] sm:$0xff]
    %v67 = vld [vmem:[%s2 + $0x48] sm:$0xff]
    %v68 = vld [vmem:[%s2 + $0x50] sm:$0xff]
    %v69 = vld [vmem:[%s2 + $0x58] sm:$0xff]
    %v70 = vld [vmem:[%s2 + $0x60] sm:$0xff]
    %v71 = vld [vmem:[%s2 + $0x68] sm:$0xff]
    %v72 = vld [vmem:[%s2 + $0x70] sm:$0xff]
    %v73 = vld [vmem:[%s2 + $0x78] sm:$0xff]
    %74 = vmatprep.subr.mxu0 0.0
    %75 = vmatpush1.msra.mxu0 %v58
    %76 = vmatprep.subr.mxu0 0.0
    %77 = vmatpush1.msra.mxu0 %v59
    %78 = vmatprep.subr.mxu0 0.0
    %79 = vmatpush1.msra.mxu0 %v60
    %80 = vmatprep.subr.mxu0 0.0
    %81 = vmatpush1.msra.mxu0 %v61
    %82 = vmatprep.subr.mxu0 0.0
    %83 = vmatpush1.msra.mxu0 %v62
    %84 = vmatprep.subr.mxu0 0.0
    %85 = vmatpush1.msra.mxu0 %v63
    %86 = vmatprep.subr.mxu0 0.0
    %87 = vmatpush1.msra.mxu0 %v64
    %88 = vmatprep.subr.mxu0 0.0
    %89 = vmatpush1.msra.mxu0 %v65
    %90 = vmatprep.subr.mxu0 0.0
    %91 = vmatpush1.msra.mxu0 %v66
    %92 = vmatprep.subr.mxu0 0.0
    %93 = vmatpush1.msra.mxu0 %v67
    %94 = vmatprep.subr.mxu0 0.0
    %95 = vmatpush1.msra.mxu0 %v68
    %96 = vmatprep.subr.mxu0 0.0
    %97 = vmatpush1.msra.mxu0 %v69
    %98 = vmatprep.subr.mxu0 0.0
    %99 = vmatpush1.msra.mxu0 %v70
    %100 = vmatprep.subr.mxu0 0.0
    %101 = vmatpush1.msra.mxu0 %v71
    %102 = vmatprep.subr.mxu0 0.0
    %103 = vmatpush1.msra.mxu0 %v72
    %104 = vmatprep.subr.mxu0 0.0
    %105 = vmatpush1.msra.mxu0 %v73
    %106 = vmatprep.subr.mxu0 0.0
    %107 = vmatpush1.msra.mxu0 0.0
    %108 = vmatprep.subr.mxu0 0.0
    %109 = vmatpush1.msra.mxu0 0.0
    %110 = vmatprep.subr.mxu0 0.0
    %111 = vmatpush1.msra.mxu0 0.0
    %112 = vmatprep.subr.mxu0 0.0
    %113 = vmatpush1.msra.mxu0 0.0
    %114 = vmatprep.subr.mxu0 0.0
    %115 = vmatpush1.msra.mxu0 0.0
    %116 = vmatprep.subr.mxu0 0.0
    %117 = vmatpush1.msra.mxu0 0.0
    %118 = vmatprep.subr.mxu0 0.0
    %119 = vmatpush1.msra.mxu0 0.0
    %120 = vmatprep.subr.mxu0 0.0
    %121 = vmatpush1.msra.mxu0 0.0
    %122 = vmatprep.subr.mxu0 0.0
    %123 = vmatpush1.msra.mxu0 0.0
    %124 = vmatprep.subr.mxu0 0.0
    %125 = vmatpush1.msra.mxu0 0.0
    %126 = vmatprep.subr.mxu0 0.0
    %127 = vmatpush1.msra.mxu0 0.0
    %128 = vmatprep.subr.mxu0 0.0
    %129 = vmatpush1.msra.mxu0 0.0
    %130 = vmatprep.subr.mxu0 0.0
    %131 = vmatpush1.msra.mxu0 0.0
    %132 = vmatprep.subr.mxu0 0.0
    %133 = vmatpush1.msra.mxu0 0.0
    %134 = vmatprep.subr.mxu0 0.0
    %135 = vmatpush1.msra.mxu0 0.0
    %136 = vmatprep.subr.mxu0 0.0
    %137 = vmatpush1.msra.mxu0 0.0
    %138 = vmatprep.mubr.f32.mxu0 0.0
    %139 = vmatmul.mubr.f32.gmra.mrb[0].mxu0 %v56
    %v140 = vpop.f32.mrb[0].mxu0
    %v141 = vadd.f32 0.0, %v140
    %v142 = vpop.f32.mrb[0].mxu0
    %143 = vdwg.mxu0
    %v144 = vadd.f32 %v57, %v141
    %vm145 = vcmask 7168
    %146 = vst.msk [vmem:[%s4] sm:$0xff] %vm145, %v144
  $region21: #{tpu_custom_call.1} parent=0 // pred_fallthru
    _
  %s147 = sld [smem:[#allocation3 + $0x1]]
  %s148 = sld [smem:[#allocation3 + $0x81]]
  %p149 = scmp.lt.s32.totalorder %s147, %s44
  %p150 = scmp.ge.s32.totalorder %s148, %s23
  %p151 = pnand %p149, %p150
  %p152 = pneg %p151
  // Predicated region
  $region22: #{tpu_custom_call.1} parent=0 // pred_check
    _
  $region23: #{tpu_custom_call.1} parent=0 // pred_check_branch
    %154 = sbr.rel (%p151) target = $region25
  $region24: #{tpu_custom_call.1} parent=0 // pred_region
    %155 = vset.pattern.permute.xlu0 1
    %156 = vperm.xlu0 %155, %v39
    %v157 = vpop.permute.xlu0 %156
    %vm158 = vcmp.eq.s32.totalorder %v157, %v41
    %v159 = vsel %vm158, 1, 0
    %v160 = vcvt.s32.f32 %v159
    %v161 = vld [vmem:[%s4] sm:$0xff]
    %v162 = vld [vmem:[%s2] sm:$0xff]
    %v163 = vld [vmem:[%s2 + $0x8] sm:$0xff]
    %v164 = vld [vmem:[%s2 + $0x10] sm:$0xff]
    %v165 = vld [vmem:[%s2 + $0x18] sm:$0xff]
    %v166 = vld [vmem:[%s2 + $0x20] sm:$0xff]
    %v167 = vld [vmem:[%s2 + $0x28] sm:$0xff]
    %v168 = vld [vmem:[%s2 + $0x30] sm:$0xff]
    %v169 = vld [vmem:[%s2 + $0x38] sm:$0xff]
    %v170 = vld [vmem:[%s2 + $0x40] sm:$0xff]
    %v171 = vld [vmem:[%s2 + $0x48] sm:$0xff]
    %v172 = vld [vmem:[%s2 + $0x50] sm:$0xff]
    %v173 = vld [vmem:[%s2 + $0x58] sm:$0xff]
    %v174 = vld [vmem:[%s2 + $0x60] sm:$0xff]
    %v175 = vld [vmem:[%s2 + $0x68] sm:$0xff]
    %v176 = vld [vmem:[%s2 + $0x70] sm:$0xff]
    %v177 = vld [vmem:[%s2 + $0x78] sm:$0xff]
    %178 = vmatprep.subr.mxu0 0.0
    %179 = vmatpush1.msra.mxu0 %v162
    %180 = vmatprep.subr.mxu0 0.0
    %181 = vmatpush1.msra.mxu0 %v163
    %182 = vmatprep.subr.mxu0 0.0
    %183 = vmatpush1.msra.mxu0 %v164
    %184 = vmatprep.subr.mxu0 0.0
    %185 = vmatpush1.msra.mxu0 %v165
    %186 = vmatprep.subr.mxu0 0.0
    %187 = vmatpush1.msra.mxu0 %v166
    %188 = vmatprep.subr.mxu0 0.0
    %189 = vmatpush1.msra.mxu0 %v167
    %190 = vmatprep.subr.mxu0 0.0
    %191 = vmatpush1.msra.mxu0 %v168
    %192 = vmatprep.subr.mxu0 0.0
    %193 = vmatpush1.msra.mxu0 %v169
    %194 = vmatprep.subr.mxu0 0.0
    %195 = vmatpush1.msra.mxu0 %v170
    %196 = vmatprep.subr.mxu0 0.0
    %197 = vmatpush1.msra.mxu0 %v171
    %198 = vmatprep.subr.mxu0 0.0
    %199 = vmatpush1.msra.mxu0 %v172
    %200 = vmatprep.subr.mxu0 0.0
    %201 = vmatpush1.msra.mxu0 %v173
    %202 = vmatprep.subr.mxu0 0.0
    %203 = vmatpush1.msra.mxu0 %v174
    %204 = vmatprep.subr.mxu0 0.0
    %205 = vmatpush1.msra.mxu0 %v175
    %206 = vmatprep.subr.mxu0 0.0
    %207 = vmatpush1.msra.mxu0 %v176
    %208 = vmatprep.subr.mxu0 0.0
    %209 = vmatpush1.msra.mxu0 %v177
    %210 = vmatprep.subr.mxu0 0.0
    %211 = vmatpush1.msra.mxu0 0.0
    %212 = vmatprep.subr.mxu0 0.0
    %213 = vmatpush1.msra.mxu0 0.0
    %214 = vmatprep.subr.mxu0 0.0
    %215 = vmatpush1.msra.mxu0 0.0
    %216 = vmatprep.subr.mxu0 0.0
    %217 = vmatpush1.msra.mxu0 0.0
    %218 = vmatprep.subr.mxu0 0.0
    %219 = vmatpush1.msra.mxu0 0.0
    %220 = vmatprep.subr.mxu0 0.0
    %221 = vmatpush1.msra.mxu0 0.0
    %222 = vmatprep.subr.mxu0 0.0
    %223 = vmatpush1.msra.mxu0 0.0
    %224 = vmatprep.subr.mxu0 0.0
    %225 = vmatpush1.msra.mxu0 0.0
    %226 = vmatprep.subr.mxu0 0.0
    %227 = vmatpush1.msra.mxu0 0.0
    %228 = vmatprep.subr.mxu0 0.0
    %229 = vmatpush1.msra.mxu0 0.0
    %230 = vmatprep.subr.mxu0 0.0
    %231 = vmatpush1.msra.mxu0 0.0
    %232 = vmatprep.subr.mxu0 0.0
    %233 = vmatpush1.msra.mxu0 0.0
    %234 = vmatprep.subr.mxu0 0.0
    %235 = vmatpush1.msra.mxu0 0.0
    %236 = vmatprep.subr.mxu0 0.0
    %237 = vmatpush1.msra.mxu0 0.0
    %238 = vmatprep.subr.mxu0 0.0
    %239 = vmatpush1.msra.mxu0 0.0
    %240 = vmatprep.subr.mxu0 0.0
    %241 = vmatpush1.msra.mxu0 0.0
    %242 = vmatprep.mubr.f32.mxu0 0.0
    %243 = vmatmul.mubr.f32.gmra.mrb[0].mxu0 %v160
    %v244 = vpop.f32.mrb[0].mxu0
    %v245 = vadd.f32 0.0, %v244
    %v246 = vpop.f32.mrb[0].mxu0
    %247 = vdwg.mxu0
    %v248 = vadd.f32 %v161, %v245
    %vm249 = vcmask 7168
    %250 = vst.msk [vmem:[%s4] sm:$0xff] %vm249, %v248
  $region25: #{tpu_custom_call.1} parent=0 // pred_fallthru
    _
  %s251 = sld [smem:[#allocation3 + $0x2]]
  %s252 = sld [smem:[#allocation3 + $0x82]]
  %p253 = scmp.lt.s32.totalorder %s251, %s44
  %p254 = scmp.ge.s32.totalorder %s252, %s23
  %p255 = pnand %p253, %p254
  %p256 = pneg %p255
  // Predicated region
  $region26: #{tpu_custom_call.1} parent=0 // pred_check
    _
  $region27: #{tpu_custom_call.1} parent=0 // pred_check_branch
    %258 = sbr.rel (%p255) target = $region29
  $region28: #{tpu_custom_call.1} parent=0 // pred_region
    %259 = vset.pattern.permute.xlu0 2
    %260 = vperm.xlu0 %259, %v39
    %v261 = vpop.permute.xlu0 %260
    %vm262 = vcmp.eq.s32.totalorder %v261, %v41
    %v263 = vsel %vm262, 1, 0
    %v264 = vcvt.s32.f32 %v263
    %v265 = vld [vmem:[%s4] sm:$0xff]
    %v266 = vld [vmem:[%s2] sm:$0xff]
    %v267 = vld [vmem:[%s2 + $0x8] sm:$0xff]
    %v268 = vld [vmem:[%s2 + $0x10] sm:$0xff]
    %v269 = vld [vmem:[%s2 + $0x18] sm:$0xff]
    %v270 = vld [vmem:[%s2 + $0x20] sm:$0xff]
    %v271 = vld [vmem:[%s2 + $0x28] sm:$0xff]
    %v272 = vld [vmem:[%s2 + $0x30] sm:$0xff]
    %v273 = vld [vmem:[%s2 + $0x38] sm:$0xff]
    %v274 = vld [vmem:[%s2 + $0x40] sm:$0xff]
    %v275 = vld [vmem:[%s2 + $0x48] sm:$0xff]
    %v276 = vld [vmem:[%s2 + $0x50] sm:$0xff]
    %v277 = vld [vmem:[%s2 + $0x58] sm:$0xff]
    %v278 = vld [vmem:[%s2 + $0x60] sm:$0xff]
    %v279 = vld [vmem:[%s2 + $0x68] sm:$0xff]
    %v280 = vld [vmem:[%s2 + $0x70] sm:$0xff]
    %v281 = vld [vmem:[%s2 + $0x78] sm:$0xff]
    %282 = vmatprep.subr.mxu0 0.0
    %283 = vmatpush1.msra.mxu0 %v266
    %284 = vmatprep.subr.mxu0 0.0
    %285 = vmatpush1.msra.mxu0 %v267
    %286 = vmatprep.subr.mxu0 0.0
    %287 = vmatpush1.msra.mxu0 %v268
    %288 = vmatprep.subr.mxu0 0.0
    %289 = vmatpush1.msra.mxu0 %v269
    %290 = vmatprep.subr.mxu0 0.0
    %291 = vmatpush1.msra.mxu0 %v270
    %292 = vmatprep.subr.mxu0 0.0
    %293 = vmatpush1.msra.mxu0 %v271
    %294 = vmatprep.subr.mxu0 0.0
    %295 = vmatpush1.msra.mxu0 %v272
    %296 = vmatprep.subr.mxu0 0.0
    %297 = vmatpush1.msra.mxu0 %v273
    %298 = vmatprep.subr.mxu0 0.0
    %299 = vmatpush1.msra.mxu0 %v274
    %300 = vmatprep.subr.mxu0 0.0
    %301 = vmatpush1.msra.mxu0 %v275
    %302 = vmatprep.subr.mxu0 0.0
    %303 = vmatpush1.msra.mxu0 %v276
    %304 = vmatprep.subr.mxu0 0.0
    %305 = vmatpush1.msra.mxu0 %v277
    %306 = vmatprep.subr.mxu0 0.0
    %307 = vmatpush1.msra.mxu0 %v278
    %308 = vmatprep.subr.mxu0 0.0
    %309 = vmatpush1.msra.mxu0 %v279
    %310 = vmatprep.subr.mxu0 0.0
    %311 = vmatpush1.msra.mxu0 %v280
    %312 = vmatprep.subr.mxu0 0.0
    %313 = vmatpush1.msra.mxu0 %v281
    %314 = vmatprep.subr.mxu0 0.0
    %315 = vmatpush1.msra.mxu0 0.0
    %316 = vmatprep.subr.mxu0 0.0
    %317 = vmatpush1.msra.mxu0 0.0
    %318 = vmatprep.subr.mxu0 0.0
    %319 = vmatpush1.msra.mxu0 0.0
    %320 = vmatprep.subr.mxu0 0.0
    %321 = vmatpush1.msra.mxu0 0.0
    %322 = vmatprep.subr.mxu0 0.0
    %323 = vmatpush1.msra.mxu0 0.0
    %324 = vmatprep.subr.mxu0 0.0
    %325 = vmatpush1.msra.mxu0 0.0
    %326 = vmatprep.subr.mxu0 0.0
    %327 = vmatpush1.msra.mxu0 0.0
    %328 = vmatprep.subr.mxu0 0.0
    %329 = vmatpush1.msra.mxu0 0.0
    %330 = vmatprep.subr.mxu0 0.0
    %331 = vmatpush1.msra.mxu0 0.0
    %332 = vmatprep.subr.mxu0 0.0
    %333 = vmatpush1.msra.mxu0 0.0
    %334 = vmatprep.subr.mxu0 0.0
    %335 = vmatpush1.msra.mxu0 0.0
    %336 = vmatprep.subr.mxu0 0.0
    %337 = vmatpush1.msra.mxu0 0.0
    %338 = vmatprep.subr.mxu0 0.0
    %339 = vmatpush1.msra.mxu0 0.0
    %340 = vmatprep.subr.mxu0 0.0
    %341 = vmatpush1.msra.mxu0 0.0
    %342 = vmatprep.subr.mxu0 0.0
    %343 = vmatpush1.msra.mxu0 0.0
    %344 = vmatprep.subr.mxu0 0.0
    %345 = vmatpush1.msra.mxu0 0.0
    %346 = vmatprep.mubr.f32.mxu0 0.0
    %347 = vmatmul.mubr.f32.gmra.mrb[0].mxu0 %v264
    %v348 = vpop.f32.mrb[0].mxu0
    %v349 = vadd.f32 0.0, %v348
    %v350 = vpop.f32.mrb[0].mxu0
    %351 = vdwg.mxu0
    %v352 = vadd.f32 %v265, %v349
    %vm353 = vcmask 7168
    %354 = vst.msk [vmem:[%s4] sm:$0xff] %vm353, %v352
  $region29: #{tpu_custom_call.1} parent=0 // pred_fallthru
    _
  %s355 = sld [smem:[#allocation3 + $0x3]]
  %s356 = sld [smem:[#allocation3 + $0x83]]
  %p357 = scmp.lt.s32.totalorder %s355, %s44
  %p358 = scmp.ge.s32.totalorder %s356, %s23
  %p359 = pnand %p357, %p358
  %p360 = pneg %p359
  // Predicated region
  $region30: #{tpu_custom_call.1} parent=0 // pred_check
    _
  $region31: #{tpu_custom_call.1} parent=0 // pred_check_branch
    %362 = sbr.rel (%p359) target = $region33
  $region32: #{tpu_custom_call.1} parent=0 // pred_region
    %363 = vset.pattern.permute.xlu0 3
    %364 = vperm.xlu0 %363, %v39
    %v365 = vpop.permute.xlu0 %364
    %vm366 = vcmp.eq.s32.totalorder %v365, %v41
    %v367 = vsel %vm366, 1, 0
    %v368 = vcvt.s32.f32 %v367
    %v369 = vld [vmem:[%s4] sm:$0xff]
    %v370 = vld [vmem:[%s2] sm:$0xff]
    %v371 = vld [vmem:[%s2 + $0x8] sm:$0xff]
    %v372 = vld [vmem:[%s2 + $0x10] sm:$0xff]
    %v373 = vld [vmem:[%s2 + $0x18] sm:$0xff]
    %v374 = vld [vmem:[%s2 + $0x20] sm:$0xff]
    %v375 = vld [vmem:[%s2 + $0x28] sm:$0xff]
    %v376 = vld [vmem:[%s2 + $0x30] sm:$0xff]
    %v377 = vld [vmem:[%s2 + $0x38] sm:$0xff]
    %v378 = vld [vmem:[%s2 + $0x40] sm:$0xff]
    %v379 = vld [vmem:[%s2 + $0x48] sm:$0xff]
    %v380 = vld [vmem:[%s2 + $0x50] sm:$0xff]
    %v381 = vld [vmem:[%s2 + $0x58] sm:$0xff]
    %v382 = vld [vmem:[%s2 + $0x60] sm:$0xff]
    %v383 = vld [vmem:[%s2 + $0x68] sm:$0xff]
    %v384 = vld [vmem:[%s2 + $0x70] sm:$0xff]
    %v385 = vld [vmem:[%s2 + $0x78] sm:$0xff]
    %386 = vmatprep.subr.mxu0 0.0
    %387 = vmatpush1.msra.mxu0 %v370
    %388 = vmatprep.subr.mxu0 0.0
    %389 = vmatpush1.msra.mxu0 %v371
    %390 = vmatprep.subr.mxu0 0.0
    %391 = vmatpush1.msra.mxu0 %v372
    %392 = vmatprep.subr.mxu0 0.0
    %393 = vmatpush1.msra.mxu0 %v373
    %394 = vmatprep.subr.mxu0 0.0
    %395 = vmatpush1.msra.mxu0 %v374
    %396 = vmatprep.subr.mxu0 0.0
    %397 = vmatpush1.msra.mxu0 %v375
    %398 = vmatprep.subr.mxu0 0.0
    %399 = vmatpush1.msra.mxu0 %v376
    %400 = vmatprep.subr.mxu0 0.0
    %401 = vmatpush1.msra.mxu0 %v377
    %402 = vmatprep.subr.mxu0 0.0
    %403 = vmatpush1.msra.mxu0 %v378
    %404 = vmatprep.subr.mxu0 0.0
    %405 = vmatpush1.msra.mxu0 %v379
    %406 = vmatprep.subr.mxu0 0.0
    %407 = vmatpush1.msra.mxu0 %v380
    %408 = vmatprep.subr.mxu0 0.0
    %409 = vmatpush1.msra.mxu0 %v381
    %410 = vmatprep.subr.mxu0 0.0
    %411 = vmatpush1.msra.mxu0 %v382
    %412 = vmatprep.subr.mxu0 0.0
    %413 = vmatpush1.msra.mxu0 %v383
    %414 = vmatprep.subr.mxu0 0.0
    %415 = vmatpush1.msra.mxu0 %v384
    %416 = vmatprep.subr.mxu0 0.0
    %417 = vmatpush1.msra.mxu0 %v385
    %418 = vmatprep.subr.mxu0 0.0
    %419 = vmatpush1.msra.mxu0 0.0
    %420 = vmatprep.subr.mxu0 0.0
    %421 = vmatpush1.msra.mxu0 0.0
    %422 = vmatprep.subr.mxu0 0.0
    %423 = vmatpush1.msra.mxu0 0.0
    %424 = vmatprep.subr.mxu0 0.0
    %425 = vmatpush1.msra.mxu0 0.0
    %426 = vmatprep.subr.mxu0 0.0
    %427 = vmatpush1.msra.mxu0 0.0
    %428 = vmatprep.subr.mxu0 0.0
    %429 = vmatpush1.msra.mxu0 0.0
    %430 = vmatprep.subr.mxu0 0.0
    %431 = vmatpush1.msra.mxu0 0.0
    %432 = vmatprep.subr.mxu0 0.0
    %433 = vmatpush1.msra.mxu0 0.0
    %434 = vmatprep.subr.mxu0 0.0
    %435 = vmatpush1.msra.mxu0 0.0
    %436 = vmatprep.subr.mxu0 0.0
    %437 = vmatpush1.msra.mxu0 0.0
    %438 = vmatprep.subr.mxu0 0.0
    %439 = vmatpush1.msra.mxu0 0.0
    %440 = vmatprep.subr.mxu0 0.0
    %441 = vmatpush1.msra.mxu0 0.0
    %442 = vmatprep.subr.mxu0 0.0
    %443 = vmatpush1.msra.mxu0 0.0
    %444 = vmatprep.subr.mxu0 0.0
    %445 = vmatpush1.msra.mxu0 0.0
    %446 = vmatprep.subr.mxu0 0.0
    %447 = vmatpush1.msra.mxu0 0.0
    %448 = vmatprep.subr.mxu0 0.0
    %449 = vmatpush1.msra.mxu0 0.0
    %450 = vmatprep.mubr.f32.mxu0 0.0
    %451 = vmatmul.mubr.f32.gmra.mrb[0].mxu0 %v368
    %v452 = vpop.f32.mrb[0].mxu0
    %v453 = vadd.f32 0.0, %v452
    %v454 = vpop.f32.mrb[0].mxu0
    %455 = vdwg.mxu0
    %v456 = vadd.f32 %v369, %v453
    %vm457 = vcmask 7168
    %458 = vst.msk [vmem:[%s4] sm:$0xff] %vm457, %v456
  $region33: #{tpu_custom_call.1} parent=0 // pred_fallthru
    _
  // Predicated region
  $region34: #{tpu_custom_call.1} parent=0 // pred_check
    _
  $region35: #{tpu_custom_call.1} parent=0 // pred_check_branch
    %460 = sbr.rel (0) target = $region37
  $region36: #{tpu_custom_call.1} parent=0 // pred_region
    _
  $region37: #{tpu_custom_call.1} parent=0 // pred_fallthru
    _
  // Predicated region
  $region38: #{tpu_custom_call.1} parent=0 // pred_check
    _
  $region39: #{tpu_custom_call.1} parent=0 // pred_check_branch
    %462 = sbr.rel (0) target = $region41
  $region40: #{tpu_custom_call.1} parent=0 // pred_region
    _
  $region41: #{tpu_custom_call.1} parent=0 // pred_fallthru
    _

</llo_original>
